<compile_context>
chip_gen: v6e
topology: v6e:2x2x1
jax: 0.10.0
libtpu: 0.0.40
codegen_flags: <defaults>
</compile_context>

<pallas_src>
import math

import jax
import jax.numpy as jnp
from jax.experimental import pallas as pl
from jax.experimental.pallas import tpu as pltpu

_LANES = 128
_ROW_MULT = 16                      # sublane multiple (bf16-safe; fine for f32)
_SOFT_CAP_ROWS = 2048               # amortize ~0.35us/step overhead
_BYTE_BUDGET = 4 * 1024 * 1024      # per-block bytes (x2 for double buffering)


def _round_up(x, m):
    return (x + m - 1) // m * m


# --------------------------------- kernel -----------------------------------
def _pe_affine_kernel(a_ref, b_ref, o_ref):
    """pe tile via separable affine form: out[r, c] = sin(row(r) * A[c] + B[c]).

    a_ref, b_ref: (1, L) f32 lane-coefficient vectors (constant across steps).
    o_ref:        (T, L) output tile.
    """
    t, _ = o_ref.shape
    row = (jax.lax.broadcasted_iota(jnp.int32, (t, 1), 0)
           + pl.program_id(0) * t).astype(jnp.float32)
    o_ref[...] = jnp.sin(row * a_ref[...] + b_ref[...]).astype(o_ref.dtype)


# ------------------------------ host helpers ---------------------------------
def _inv_freq_phase(d_model):
    col = jnp.arange(d_model)
    inv_freq = jnp.exp((2 * (col // 2)).astype(jnp.float32)
                       * (-(math.log(10000.0) / d_model)))
    phase = (col % 2).astype(jnp.float32) * (math.pi / 2.0)   # sin(x+pi/2)=cos(x)
    return inv_freq, phase


def _choose_tile(n_rows, row_bytes):
    """Largest row-tile under the byte budget / soft cap, minimizing padding."""
    max_rows = max(_ROW_MULT, (_BYTE_BUDGET // max(row_bytes, 1))
                   // _ROW_MULT * _ROW_MULT)
    cap = min(_SOFT_CAP_ROWS, max_rows)
    steps = pl.cdiv(n_rows, cap)
    tile = _round_up(pl.cdiv(n_rows, steps), _ROW_MULT)
    return tile, steps


def _build_pe(seq_len, d_model, dtype):
    itemsize = jnp.dtype(dtype).itemsize
    inv_freq, phase = _inv_freq_phase(d_model)
    compiler_params = pltpu.CompilerParams(dimension_semantics=("parallel",))
    coeff_spec = lambda L: pl.BlockSpec((1, L), lambda i: (0, 0))

    if d_model < _LANES and _LANES % d_model == 0:
        # ---- lane-dense flattened layout: pe viewed as (seq*d_model/128, 128).
        # flat index f = r*128 + c  ->  pos = r*per_row + c//d_model, col = c%d_model
        # angle = pos*inv_freq[col] + phase[col] = r*A[c] + B[c]   (per_row exact pow2)
        per_row = _LANES // d_model
        lane = jnp.arange(_LANES)
        col = lane % d_model
        a = (per_row * inv_freq[col])[None, :].astype(jnp.float32)
        b = ((lane // d_model).astype(jnp.float32) * inv_freq[col]
             + phase[col])[None, :].astype(jnp.float32)

        n_rows = pl.cdiv(seq_len, per_row)
        tile, steps = _choose_tile(n_rows, _LANES * itemsize)
        rows_pad = steps * tile
        slab = pl.pallas_call(
            _pe_affine_kernel,
            out_shape=jax.ShapeDtypeStruct((rows_pad, _LANES), dtype),
            grid=(steps,),
            in_specs=[coeff_spec(_LANES), coeff_spec(_LANES)],
            out_specs=pl.BlockSpec((tile, _LANES), lambda i: (i, 0)),
            compiler_params=compiler_params,
        )(a, b)
        pe = slab.reshape(rows_pad * per_row, d_model)[:seq_len]
        return pe[None]

    # ---- natural (seq, d_model) layout --------------------------------------
    # Lane dense when d_model % 128 == 0.
    # TODO(synk): d_model not aligned to 128 (e.g. 96) emits masked vst.msk
    # partial stores; a fully lane-dense layout for those sizes would need a
    # per-element div/mod or gather, so the natural layout is kept as fallback.
    a = inv_freq[None, :].astype(jnp.float32)
    b = phase[None, :].astype(jnp.float32)
    tile, steps = _choose_tile(seq_len, d_model * itemsize)
    seq_pad = steps * tile
    pe = pl.pallas_call(
        _pe_affine_kernel,
        out_shape=jax.ShapeDtypeStruct((seq_pad, d_model), dtype),
        grid=(steps,),
        in_specs=[coeff_spec(d_model), coeff_spec(d_model)],
        out_specs=pl.BlockSpec((tile, d_model), lambda i: (i, 0)),
        compiler_params=compiler_params,
    )(a, b)
    return pe[:seq_len][None]


# --------------------------------- wrapper -----------------------------------
_PE_CACHE = {}


def positional_embedding_pallas(x, *, d_model, max_len=80000, dtype=jnp.float32):
    """Forward of PositionalEmbedding: returns pe[None, :x.shape[1], :]."""
    seq_len = min(int(x.shape[1]), max_len)   # torch slice clamps at max_len
    key = (seq_len, int(d_model), jnp.dtype(dtype).name)
    cached = _PE_CACHE.get(key)
    if cached is not None:
        return cached
    pe = _build_pe(seq_len, d_model, dtype)
    try:
        concrete = not isinstance(pe, jax.core.Tracer)   # don't cache under jit trace
    except AttributeError:
        concrete = False
    if concrete:
        _PE_CACHE[key] = pe
    return pe


# --------------------------------- reference ---------------------------------
def positional_embedding_ref(x, *, d_model, max_len=80000, dtype=jnp.float32):
    seq_len = min(int(x.shape[1]), max_len)
    position = jnp.arange(seq_len, dtype=jnp.float32)[:, None]
    div_term = jnp.exp(jnp.arange(0, d_model, 2, dtype=jnp.float32)
                       * -(math.log(10000.0) / d_model))
    pe = jnp.zeros((seq_len, d_model), jnp.float32)
    pe = pe.at[:, 0::2].set(jnp.sin(position * div_term))
    pe = pe.at[:, 1::2].set(jnp.cos(position * div_term))
    return pe[None].astype(dtype)


# ------------------------------------ main ------------------------------------
if __name__ == "__main__":
    key = jax.random.PRNGKey(0)

    # Main check: small shapes, lane-dense flat path (d_model divides 128).
    B, seq_len, d_model = 2, 16, 32
    x = jax.random.normal(key, (B, seq_len, d_model), dtype=jnp.float32)

    out = jax.block_until_ready(positional_embedding_pallas(x, d_model=d_model))
    ref = positional_embedding_ref(x, d_model=d_model)

    assert out.shape == (1, seq_len, d_model), out.shape
    assert out.shape == ref.shape
    assert jnp.allclose(out, ref, atol=1e-4, rtol=1e-4), \
        float(jnp.max(jnp.abs(out - ref)))

    # Path checks: d_model multiple of 128 (natural lane-dense layout) and an
    # awkward d_model (fallback path).  Small shapes, exact same semantics.
    for s, d in ((64, 128), (48, 96)):
        xi = jnp.zeros((1, s, d), jnp.float32)
        oi = jax.block_until_ready(positional_embedding_pallas(xi, d_model=d))
        ri = positional_embedding_ref(xi, d_model=d)
        assert oi.shape == ri.shape == (1, s, d)
        assert jnp.allclose(oi, ri, atol=1e-4, rtol=1e-4), \
            (s, d, float(jnp.max(jnp.abs(oi - ri))))

    print("KERNEL_OK")
</pallas_src>

<mosaic_0001>
module attributes {stable_mosaic.version = 11 : i64} {
  func.func @_pe_affine_kernel(%arg0: i32, %arg1: memref<1x128xf32, #tpu.memory_space<vmem>>, %arg2: memref<1x128xf32, #tpu.memory_space<vmem>>, %arg3: memref<16x128xf32, #tpu.memory_space<vmem>>) attributes {dimension_semantics = [#tpu.dimension_semantics<parallel>], iteration_bounds = array<i64: 1>, scalar_prefetch = 0 : i64, scratch_operands = 0 : i64, tpu.core_type = #tpu.core_type<tc>, window_params = [{pipeline_mode = #tpu.pipeline_mode<synchronous>, transform_indices = @transform_0, window_bounds = array<i64: 1, 128>}, {pipeline_mode = #tpu.pipeline_mode<synchronous>, transform_indices = @transform_1, window_bounds = array<i64: 1, 128>}, {transform_indices = @transform_2, window_bounds = array<i64: 16, 128>}]} {
    %0 = tpu.iota {dimensions = array<i32: 0>} : vector<16x1xi32>
    %c16_i32 = arith.constant 16 : i32
    %1 = arith.muli %arg0, %c16_i32 : i32
    %2 = vector.broadcast %1 : i32 to vector<16x1xi32>
    %3 = arith.addi %0, %2 : vector<16x1xi32>
    %4 = arith.sitofp %3 : vector<16x1xi32> to vector<16x1xf32>
    %c0 = arith.constant 0 : index
    %c0_0 = arith.constant 0 : index
    %5 = vector.load %arg1[%c0, %c0_0] : memref<1x128xf32, #tpu.memory_space<vmem>>, vector<1x128xf32>
    %6 = vector.broadcast %4 : vector<16x1xf32> to vector<16x128xf32>
    %7 = vector.broadcast %5 : vector<1x128xf32> to vector<16x128xf32>
    %8 = arith.mulf %6, %7 : vector<16x128xf32>
    %c0_1 = arith.constant 0 : index
    %c0_2 = arith.constant 0 : index
    %9 = vector.load %arg2[%c0_1, %c0_2] : memref<1x128xf32, #tpu.memory_space<vmem>>, vector<1x128xf32>
    %10 = vector.broadcast %9 : vector<1x128xf32> to vector<16x128xf32>
    %11 = arith.addf %8, %10 : vector<16x128xf32>
    %12 = math.sin %11 : vector<16x128xf32>
    %c0_3 = arith.constant 0 : index
    %c0_4 = arith.constant 0 : index
    %13 = vector.load %arg3[%c0_3, %c0_4] : memref<16x128xf32, #tpu.memory_space<vmem>>, vector<16x128xf32>
    tpu.vector_store %arg3[%c0_3, %c0_4], %12 {strides = array<i32>} : memref<16x128xf32, #tpu.memory_space<vmem>>, vector<16x128xf32>,
    return
  }
  func.func @transform_0(%arg0: i32) -> (i32, i32) {
    %c0_i32 = arith.constant 0 : i32
    %c0_i32_0 = arith.constant 0 : i32
    %c0_i32_1 = arith.constant 0 : i32
    return %c0_i32, %c0_i32_0 : i32, i32
  }
  func.func @transform_1(%arg0: i32) -> (i32, i32) {
    %c0_i32 = arith.constant 0 : i32
    %c0_i32_0 = arith.constant 0 : i32
    %c0_i32_1 = arith.constant 0 : i32
    return %c0_i32, %c0_i32_0 : i32, i32
  }
  func.func @transform_2(%arg0: i32) -> (i32, i32) {
    %c0_i32 = arith.constant 0 : i32
    %c0_i32_0 = arith.constant 0 : i32
    return %arg0, %c0_i32 : i32, i32
  }
}

</mosaic_0001>

<llo_original>
// kernel: tpu_custom_call.1
$region0: #{tpu_custom_call.1}
  #allocation0 [shape = 'u32[]', space=smem, size = 0x4, offset = 0x4, fixed_abs, tag = 'smem constant byte address 0x4 - core index']
  #allocation1 [shape = 'u32[144,128]{1,0:T(1,128)}', space=vmem, size = 0x12000, scoped, tag = 'internal scratch']
  %s0 = inlined_call_operand.hbm [shape: f32[1,128], index: 0, kind: input, shape index: {}]
  %s1 = inlined_call_operand.vmem [shape: f32[1,128], index: 1, kind: input, shape index: {}]
  %s2 = inlined_call_operand.hbm [shape: f32[16,128], index: 2, kind: output, shape index: {}]
  %s3 = sld [smem:[#allocation0]]
  $region22: #{tpu_custom_call.1} parent=0
    _
  %s5 = ssub.s32 1, %s3
  %s6 = scalar_select 0, %s5, %s3
  $region1: #{tpu_custom_call.1} parent=0
    #allocation2 [shape = 'u8[512]{0}', space=vmem, size = 0x400, scoped, tag = 'input window, operand 0, single buffered']
    #allocation3 [shape = 's32[1]{0}', space=sflag, size = 0x4, scoped, tag = 'scoped memory for tpu_custom_call.1']
    #allocation4 [shape = 's32[1]{0}', space=sflag, size = 0x4, scoped, tag = 'scoped memory for tpu_custom_call.1']
    #allocation5 [shape = 'u8[8192]{0}', space=vmem, size = 0x2000, scoped, tag = 'output window, operand 0, single buffered']
    %7 = vsyncpa [#allocation3], 0
    %8 = vsyncpa [#allocation4], 0
    // Predicated region
    $region2: #{tpu_custom_call.1} parent=1 // pred_check
      _
    $region3: #{tpu_custom_call.1} parent=1 // pred_check_branch
      %10 = sbr.rel (0) target = $region5
    $region4: #{tpu_custom_call.1} parent=1 // pred_region
      %s12 = ssub.s32 16, 16
      %13 = vsyncadd [#allocation3], %s12
      %s15 = sshll.u32 [#allocation2], 4
      %s16 = int_to_ptr.vmem [resolvable:$true] %s15
      %18 = dma.hbm_to_vmem [thread:$0]  %s0, 16, %s16, [#allocation3]
    $region5: #{tpu_custom_call.1} parent=1 // pred_fallthru
      _
    // Predicated region
    $region6: #{tpu_custom_call.1} parent=1 // pred_check
      _
    $region7: #{tpu_custom_call.1} parent=1 // pred_check_branch
      %20 = sbr.rel (0) target = $region9
    $region8: #{tpu_custom_call.1} parent=1 // pred_region
      _
    $region9: #{tpu_custom_call.1} parent=1 // pred_fallthru
      _
    // Predicated region
    $region10: #{tpu_custom_call.1} parent=1 // pred_check
      _
    $region11: #{tpu_custom_call.1} parent=1 // pred_check_branch
      %22 = sbr.rel (0) target = $region13
    $region12: #{tpu_custom_call.1} parent=1 // pred_region
      %23 = dma.done [#allocation3], 16
    $region13: #{tpu_custom_call.1} parent=1 // pred_fallthru
      _
    %v24 = vlaneseq
    %v25 = vshrl.u32 %v24, 7
    %v26 = vadd.s32 %v25, 8
    %s27 = smul.u32 0, 16
    %v28 = vstv %s27
    %v29 = vadd.s32 %v25, %v28
    %v30 = vadd.s32 %v26, %v28
    %v31 = vcvt.s32.f32 %v29
    %v32 = vcvt.s32.f32 %v30
    %v33 = vld [vmem:[#allocation2] sm:$0x1]
    %v35 = vlaneseq
    %v36 = vshrl.u32 %v35, 7
    %v37 = vsub.s32 0, %v36
    %v38 = vrot.slane %v33, %v37
    %v40 = vmul.f32 %v31, %v38
    %v41 = vmul.f32 %v32, %v38
    %v42 = vld [vmem:[%s1] sm:$0x1]
    %v44 = vlaneseq
    %v45 = vshrl.u32 %v44, 7
    %v46 = vsub.s32 0, %v45
    %v47 = vrot.slane %v42, %v46
    %v49 = vadd.f32 %v40, %v47
    %v50 = vadd.f32 %v41, %v47
    %v51 = vand.u32 2147483647, %v49
    %vm52 = vcmp.le.f32.partialorder %v51, 0.7853982
    %vm53 = vcmp.lt.s32.totalorder %v49, 0
    %v54 = vand.u32 %v49, 2139095040
    %v55 = vshrl.u32 %v54, 23
    %v56 = vsub.s32 %v55, 127
    %v57 = vand.u32 2147483647, %v49
    %v58 = vand.u32 %v57, 8388607
    %v59 = vor.u32 %v58, 8388608
    %v60 = vsub.s32 0, %v59
    %v61 = vadd.s32 %v56, 1
    %vm62 = vcmp.gt.s32.totalorder %v61, 0
    %v63 = vsel %vm62, %v61, 0
    %v64 = vshrl.u32 %v63, 5
    %v65 = vand.u32 %v63, 31
    %v66 = vsub.s32 32, %v65
    %v67 = vshrl.u32 683565275, %v66
    %v68 = vshll.u32 683565275, %v65
    %v69 = vshrl.u32 2475754826, %v66
    %v70 = vor.u32 %v68, %v69
    %v71 = vshll.u32 2475754826, %v65
    %v72 = vshrl.u32 2131351028, %v66
    %v73 = vor.u32 %v71, %v72
    %v74 = vshll.u32 2131351028, %v65
    %v75 = vshrl.u32 2102212464, %v66
    %v76 = vor.u32 %v74, %v75
    %v77 = vshll.u32 2102212464, %v65
    %v78 = vshrl.u32 920167782, %v66
    %v79 = vor.u32 %v77, %v78
    %v80 = vshll.u32 920167782, %v65
    %v81 = vshrl.u32 1326507024, %v66
    %v82 = vor.u32 %v80, %v81
    %vm83 = vcmp.lt.s32.totalorder %v64, 1
    %vm84 = vcmp.lt.s32.totalorder %v64, 2
    %vm85 = vcmp.lt.s32.totalorder %v64, 3
    %vm86 = vcmp.lt.s32.totalorder %v64, 4
    %v87 = vsel %vm83, %v67, %v70
    %v88 = vsel %vm86, %v76, 2102212464
    %v89 = vsel %vm85, %v73, %v88
    %v90 = vsel %vm84, %v87, %v89
    %v91 = vsel %vm83, %v70, %v73
    %v92 = vsel %vm86, %v79, 920167782
    %v93 = vsel %vm85, %v76, %v92
    %v94 = vsel %vm84, %v91, %v93
    %v95 = vsel %vm83, %v73, %v76
    %v96 = vsel %vm86, %v82, 1326507024
    %v97 = vsel %vm85, %v79, %v96
    %v98 = vsel %vm84, %v95, %v97
    %v99 = vshll.u32 %v59, 8
    %v100 = vmul.u32.u64.compose %v99, %v98
    %v101 = vextract.low.u32 %v100
    %v102 = vextract.high.u32 %v100
    %v103 = vmul.u32.u64.compose %v99, %v94
    %v104 = vextract.low.u32 %v103
    %v105 = vextract.high.u32 %v103
    %v106 = vmul.u32 %v99, %v90
    %v107 = vadd.s32 %v102, %v104
    %vm108 = vc.u32 %v102, %v104
    %v109 = vadd.s32 %v105, 1
    %v110 = vsel %vm108, %v109, %v105
    %v111 = vadd.s32 %v106, %v110
    %v112 = vadd.s32 %v111, 536870912
    %v113 = vshrl.u32 %v112, 30
    %v114 = vshll.u32 %v113, 30
    %v115 = vsub.s32 %v111, %v114
    %vm116 = vcmp.lt.s32.totalorder %v115, 0
    %v117 = vsub.s32 0, %v115
    %v118 = vsel %vm116, %v117, %v115
    %v119 = vclz %v118
    %v120 = vsub.s32 %v119, 2
    %vm121 = vcmp.gt.s32.totalorder 0, %v120
    %v122 = vsel %vm121, 0, %v120
    %v123 = vsub.s32 32, %v122
    %v124 = vshll.u32 %v115, %v122
    %v125 = vshrl.u32 %v107, %v123
    %v126 = vor.u32 %v124, %v125
    %v127 = vsub.s32 4294967266, %v122
    %v128 = vadd.s32 %v127, 127
    %v129 = vshll.u32 %v128, 23
    %v130 = vor.u32 4788187, %v129
    %v131 = vand.u32 2147483647, %v130
    %v133 = vcvt.s32.f32 %v126
    %v134 = vmul.f32 %v133, %v131
    %v135 = vxor.u32 %v134, 2147483648
    %v136 = vsel %vm53, %v135, %v134
    %v137 = vsub.s32 4, %v113
    %v138 = vsel %vm53, %v137, %v113
    %v139 = vsel %vm52, %v49, %v136
    %v140 = vsel %vm52, 0, %v138
    %v141 = vcosq.f32.pop %v139
    %v142 = vsinq.f32.pop %v139
    %vm143 = vweird.f32 %v49
    %v144 = vadd.s32 %v140, 3
    %v145 = vand.u32 %v144, 3
    %vm146 = vcmp.lt.s32.totalorder %v145, 2
    %vm147 = vcmp.eq.s32.totalorder %v145, 0
    %v148 = vxor.u32 %v142, 2147483648
    %v149 = vsel %vm147, %v141, %v148
    %vm150 = vcmp.eq.s32.totalorder %v145, 2
    %v151 = vxor.u32 %v141, 2147483648
    %v152 = vsel %vm150, %v151, %v142
    %v153 = vsel %vm146, %v149, %v152
    %v154 = vsel %vm143, nan, %v153
    %v155 = vand.u32 2147483647, %v50
    %vm156 = vcmp.le.f32.partialorder %v155, 0.7853982
    %vm157 = vcmp.lt.s32.totalorder %v50, 0
    %v158 = vand.u32 %v50, 2139095040
    %v159 = vshrl.u32 %v158, 23
    %v160 = vsub.s32 %v159, 127
    %v161 = vand.u32 2147483647, %v50
    %v162 = vand.u32 %v161, 8388607
    %v163 = vor.u32 %v162, 8388608
    %v164 = vsub.s32 0, %v163
    %v165 = vadd.s32 %v160, 1
    %vm166 = vcmp.gt.s32.totalorder %v165, 0
    %v167 = vsel %vm166, %v165, 0
    %v168 = vshrl.u32 %v167, 5
    %v169 = vand.u32 %v167, 31
    %v170 = vsub.s32 32, %v169
    %v171 = vshrl.u32 683565275, %v170
    %v172 = vshll.u32 683565275, %v169
    %v173 = vshrl.u32 2475754826, %v170
    %v174 = vor.u32 %v172, %v173
    %v175 = vshll.u32 2475754826, %v169
    %v176 = vshrl.u32 2131351028, %v170
    %v177 = vor.u32 %v175, %v176
    %v178 = vshll.u32 2131351028, %v169
    %v179 = vshrl.u32 2102212464, %v170
    %v180 = vor.u32 %v178, %v179
    %v181 = vshll.u32 2102212464, %v169
    %v182 = vshrl.u32 920167782, %v170
    %v183 = vor.u32 %v181, %v182
    %v184 = vshll.u32 920167782, %v169
    %v185 = vshrl.u32 1326507024, %v170
    %v186 = vor.u32 %v184, %v185
    %vm187 = vcmp.lt.s32.totalorder %v168, 1
    %vm188 = vcmp.lt.s32.totalorder %v168, 2
    %vm189 = vcmp.lt.s32.totalorder %v168, 3
    %vm190 = vcmp.lt.s32.totalorder %v168, 4
    %v191 = vsel %vm187, %v171, %v174
    %v192 = vsel %vm190, %v180, 2102212464
    %v193 = vsel %vm189, %v177, %v192
    %v194 = vsel %vm188, %v191, %v193
    %v195 = vsel %vm187, %v174, %v177
    %v196 = vsel %vm190, %v183, 920167782
    %v197 = vsel %vm189, %v180, %v196
    %v198 = vsel %vm188, %v195, %v197
    %v199 = vsel %vm187, %v177, %v180
    %v200 = vsel %vm190, %v186, 1326507024
    %v201 = vsel %vm189, %v183, %v200
    %v202 = vsel %vm188, %v199, %v201
    %v203 = vshll.u32 %v163, 8
    %v204 = vmul.u32.u64.compose %v203, %v202
    %v205 = vextract.low.u32 %v204
    %v206 = vextract.high.u32 %v204
    %v207 = vmul.u32.u64.compose %v203, %v198
    %v208 = vextract.low.u32 %v207
    %v209 = vextract.high.u32 %v207
    %v210 = vmul.u32 %v203, %v194
    %v211 = vadd.s32 %v206, %v208
    %vm212 = vc.u32 %v206, %v208
    %v213 = vadd.s32 %v209, 1
    %v214 = vsel %vm212, %v213, %v209
    %v215 = vadd.s32 %v210, %v214
    %v216 = vadd.s32 %v215, 536870912
    %v217 = vshrl.u32 %v216, 30
    %v218 = vshll.u32 %v217, 30
    %v219 = vsub.s32 %v215, %v218
    %vm220 = vcmp.lt.s32.totalorder %v219, 0
    %v221 = vsub.s32 0, %v219
    %v222 = vsel %vm220, %v221, %v219
    %v223 = vclz %v222
    %v224 = vsub.s32 %v223, 2
    %vm225 = vcmp.gt.s32.totalorder 0, %v224
    %v226 = vsel %vm225, 0, %v224
    %v227 = vsub.s32 32, %v226
    %v228 = vshll.u32 %v219, %v226
    %v229 = vshrl.u32 %v211, %v227
    %v230 = vor.u32 %v228, %v229
    %v231 = vsub.s32 4294967266, %v226
    %v232 = vadd.s32 %v231, 127
    %v233 = vshll.u32 %v232, 23
    %v234 = vor.u32 4788187, %v233
    %v235 = vand.u32 2147483647, %v234
    %v237 = vcvt.s32.f32 %v230
    %v238 = vmul.f32 %v237, %v235
    %v239 = vxor.u32 %v238, 2147483648
    %v240 = vsel %vm157, %v239, %v238
    %v241 = vsub.s32 4, %v217
    %v242 = vsel %vm157, %v241, %v217
    %v243 = vsel %vm156, %v50, %v240
    %v244 = vsel %vm156, 0, %v242
    %v245 = vcosq.f32.pop %v243
    %v246 = vsinq.f32.pop %v243
    %vm247 = vweird.f32 %v50
    %v248 = vadd.s32 %v244, 3
    %v249 = vand.u32 %v248, 3
    %vm250 = vcmp.lt.s32.totalorder %v249, 2
    %vm251 = vcmp.eq.s32.totalorder %v249, 0
    %v252 = vxor.u32 %v246, 2147483648
    %v253 = vsel %vm251, %v245, %v252
    %vm254 = vcmp.eq.s32.totalorder %v249, 2
    %v255 = vxor.u32 %v245, 2147483648
    %v256 = vsel %vm254, %v255, %v246
    %v257 = vsel %vm250, %v253, %v256
    %v258 = vsel %vm247, nan, %v257
    %259 = vst [vmem:[#allocation5] sm:$0xff] %v154
    %260 = vst [vmem:[#allocation5 + $0x8] sm:$0xff] %v258
    // Predicated region
    $region14: #{tpu_custom_call.1} parent=1 // pred_check
      _
    $region15: #{tpu_custom_call.1} parent=1 // pred_check_branch
      %262 = sbr.rel (0) target = $region17
    $region16: #{tpu_custom_call.1} parent=1 // pred_region
      %s264 = ssub.s32 256, 256
      %265 = vsyncadd [#allocation4], %s264
      %s266 = sshll.u32 [#allocation5], 4
      %s267 = int_to_ptr.vmem [resolvable:$true] %s266
      %272 = dma.vmem_to_hbm [thread:$0]  %s267, 256, %s2, [#allocation4], 128, 128, 8
    $region17: #{tpu_custom_call.1} parent=1 // pred_fallthru
      _
    // Predicated region
    $region18: #{tpu_custom_call.1} parent=1 // pred_check
      _
    $region19: #{tpu_custom_call.1} parent=1 // pred_check_branch
      %274 = sbr.rel (0) target = $region21
    $region20: #{tpu_custom_call.1} parent=1 // pred_region
      %275 = dma.done [#allocation4], 256
    $region21: #{tpu_custom_call.1} parent=1 // pred_fallthru
      _
    %276 = vsyncpa [#allocation3], 1
    %277 = vsyncpa [#allocation4], 1

</llo_original>
